<compile_context>
chip_gen: v5e
topology: v5e:2x2
jax: 0.10.0
libtpu: 0.0.40
codegen_flags: <defaults>
</compile_context>

<pallas_src>
import functools

import jax
import jax.numpy as jnp
from jax import lax
from jax.experimental import pallas as pl
from jax.experimental.pallas import tpu as pltpu

_EPS = 1e-5
_NEG_INF = -1e30  # f32 mask constant (scores stay in f32)


def _layer_norm(v, g, b):
    mu = jnp.mean(v, axis=-1, keepdims=True)
    var = jnp.mean((v - mu) ** 2, axis=-1, keepdims=True)
    return (v - mu) * lax.rsqrt(var + _EPS) * g + b


# --------------------------------------------------------------------------- #
# Kernel
# --------------------------------------------------------------------------- #
def _decoder_block_kernel(seq_len, n_heads,
                          x_ref,
                          g1_ref, b1_ref,
                          wqkv_ref, wo_ref, bo_ref,
                          g2_ref, b2_ref,
                          w1_ref, bf1_ref, w2_ref, bf2_ref,
                          o_ref):
    N, E = x_ref.shape                 # N = BM * T rows in this grid step
    T = seq_len
    BM = N // T
    H = n_heads
    Dh = E // H
    scale = 1.0 / (Dh ** 0.5)

    x = x_ref[...].astype(jnp.float32)                          # (N, E)

    # ---- pre-attention LayerNorm (f32) -------------------------------------
    xn = _layer_norm(x, g1_ref[...], b1_ref[...])                # (N, E) f32
    xn16 = xn.astype(jnp.bfloat16)

    # ---- fused QKV projection: one lane-dense (E, 3E) matmul ---------------
    qkv = jnp.dot(xn16, wqkv_ref[...],
                  preferred_element_type=jnp.float32)            # (N, 3E) f32

    # Causal mask built once per grid step, broadcast over the BM batch.
    row = lax.broadcasted_iota(jnp.int32, (T, T), 0)
    col = lax.broadcasted_iota(jnp.int32, (T, T), 1)
    causal = (row >= col)[None]                                  # (1, T, T)

    # ---- causal multi-head self-attention ----------------------------------
    # Heads are static lane slices of the fused QKV result; batch rows are
    # handled by batched 3-D einsums (no per-row Python unroll / concat).
    ctx_heads = []
    for h in range(H):                                           # small static unroll over heads
        qh = (qkv[:, h * Dh:(h + 1) * Dh] * scale)
        kh = qkv[:, E + h * Dh:E + (h + 1) * Dh]
        vh = qkv[:, 2 * E + h * Dh:2 * E + (h + 1) * Dh]
        q3 = qh.reshape(BM, T, Dh).astype(jnp.bfloat16)
        k3 = kh.reshape(BM, T, Dh).astype(jnp.bfloat16)
        v3 = vh.reshape(BM, T, Dh).astype(jnp.bfloat16)

        s = jnp.einsum("bqd,bkd->bqk", q3, k3,
                       preferred_element_type=jnp.float32)       # (BM, T, T)
        s = jnp.where(causal, s, _NEG_INF)
        s = s - jnp.max(s, axis=-1, keepdims=True)
        p = jnp.exp(s)
        p = p * pl.reciprocal(jnp.sum(p, axis=-1, keepdims=True), approx=True)

        ctx = jnp.einsum("bqk,bkd->bqd", p.astype(jnp.bfloat16), v3,
                         preferred_element_type=jnp.float32)     # (BM, T, Dh)
        ctx_heads.append(ctx.reshape(N, Dh))

    ctx_all = ctx_heads[0] if H == 1 else jnp.concatenate(ctx_heads, axis=-1)  # (N, E)

    # Single lane-dense output projection.
    att = jnp.dot(ctx_all.astype(jnp.bfloat16), wo_ref[...],
                  preferred_element_type=jnp.float32) + bo_ref[...]
    # TODO(synk): attention / residual dropout omitted (identity at inference).

    y = xn + att

    # ---- pre-FFW LayerNorm (f32) --------------------------------------------
    yn = _layer_norm(y, g2_ref[...], b2_ref[...])

    # ---- feed-forward: Linear -> ReLU -> Linear (bf16 operands, f32 acc) -----
    h1 = jnp.dot(yn.astype(jnp.bfloat16), w1_ref[...],
                 preferred_element_type=jnp.float32) + bf1_ref[...]
    h1 = jnp.maximum(h1, 0.0)
    ff = jnp.dot(h1.astype(jnp.bfloat16), w2_ref[...],
                 preferred_element_type=jnp.float32) + bf2_ref[...]

    o_ref[...] = (yn + ff).astype(o_ref.dtype)


# --------------------------------------------------------------------------- #
# Generation-aware tiling helpers
# --------------------------------------------------------------------------- #
def _tpu_generation():
    try:
        kind = jax.devices()[0].device_kind.lower()
    except Exception:
        kind = ""
    if "v7" in kind:
        return "v7x"
    if "v6" in kind:
        return "v6e"
    if "v5" in kind:
        return "v5e"
    return "unknown"


def _gen_config(gen):
    # (per-step f32 activation budget, vmem_limit_bytes, min grid steps)
    if gen == "v7x":
        return 10 * 1024 * 1024, 48 * 1024 * 1024, 2   # 64 MiB VMEM, 2 TCs
    if gen == "v6e":
        return 22 * 1024 * 1024, 96 * 1024 * 1024, 1   # 128 MiB VMEM, 1 TC
    if gen == "v5e":
        return 12 * 1024 * 1024, 48 * 1024 * 1024, 1   # 128 MiB VMEM, 16 MiB scoped default
    return 10 * 1024 * 1024, 48 * 1024 * 1024, 1


def _choose_bm(B, T, E, F, budget_bytes, min_grid_steps):
    """Largest valid batch fold BM (divisor of B) whose f32 activation working
    set fits the budget, preferring BM*T a multiple of 16 (bf16 sublane tile),
    and leaving at least `min_grid_steps` grid steps (megacore on v7x)."""
    min_grid_steps = max(1, min(min_grid_steps, B))
    best = None
    for bm in range(1, B + 1):
        if B % bm:
            continue
        if (B // bm) < min_grid_steps:
            continue
        rows = bm * T
        # activations per row (f32): x, xn, qkv(3E), ctx, att, y, yn, out, h1(F), ff... ~ (9E + 2F)
        act_bytes = rows * (9 * E + 2 * F) * 4
        if act_bytes > budget_bytes:
            continue
        if best is None:
            best = bm
            continue
        cand_ok = rows % 16 == 0
        best_ok = (best * T) % 16 == 0
        if (cand_ok and not best_ok) or (cand_ok == best_ok and bm > best):
            best = bm
    return 1 if best is None else best


# --------------------------------------------------------------------------- #
# Wrapper
# --------------------------------------------------------------------------- #
def decoder_block(x, params, n_heads):
    B, T, E = x.shape
    H = n_heads
    assert E % H == 0
    F = params["w1"].shape[1]

    # Lane-dense 2-D bf16 weights; QKV columns fused -> (E, 3E).
    wqkv = jnp.concatenate([params["wq"], params["wk"], params["wv"]],
                           axis=1).astype(jnp.bfloat16)          # (E, 3E)
    wo = params["wo"].astype(jnp.bfloat16)                       # (E, E)
    w1b = params["w1"].astype(jnp.bfloat16)                      # (E, F)
    w2b = params["w2"].astype(jnp.bfloat16)                      # (F, E)

    weights = (params["g1"], params["b1"],
               wqkv, wo, params["bo"],
               params["g2"], params["b2"],
               w1b, params["bf1"], w2b, params["bf2"])

    gen = _tpu_generation()
    budget, vmem_limit, min_grid = _gen_config(gen)
    BM = _choose_bm(B, T, E, F, budget, min_grid)
    rows = BM * T
    grid = (B // BM,)

    x2 = x.reshape(B * T, E)          # fold batch into the sublane axis

    def const_spec(a):
        nd = a.ndim
        return pl.BlockSpec(a.shape, lambda i, _n=nd: (0,) * _n)

    flops = int(B * T * (8 * E * E + 4 * T * E + 4 * E * F))
    bytes_accessed = int(2 * x.size * x.dtype.itemsize
                         + sum(w.size * w.dtype.itemsize for w in weights))
    transcendentals = int(B * H * T * T)

    kernel = functools.partial(_decoder_block_kernel, T, H)
    out2 = pl.pallas_call(
        kernel,
        out_shape=jax.ShapeDtypeStruct((B * T, E), x.dtype),
        grid_spec=pltpu.PrefetchScalarGridSpec(
            num_scalar_prefetch=0,
            grid=grid,
            in_specs=[pl.BlockSpec((rows, E), lambda i: (i, 0))]
                     + [const_spec(w) for w in weights],
            out_specs=pl.BlockSpec((rows, E), lambda i: (i, 0)),
        ),
        compiler_params=pltpu.CompilerParams(
            dimension_semantics=("parallel",),
            vmem_limit_bytes=vmem_limit,
        ),
        cost_estimate=pl.CostEstimate(flops=flops,
                                      transcendentals=transcendentals,
                                      bytes_accessed=bytes_accessed),
    )(x2, *weights)
    return out2.reshape(B, T, E)


# --------------------------------------------------------------------------- #
# Pure-JAX f32 reference (same math, correctness check)
# --------------------------------------------------------------------------- #
def decoder_block_ref(x, p, n_heads):
    eps = 1e-5

    def ln(v, g, b):
        mu = jnp.mean(v, axis=-1, keepdims=True)
        var = jnp.mean((v - mu) ** 2, axis=-1, keepdims=True)
        return (v - mu) / jnp.sqrt(var + eps) * g + b

    B, T, E = x.shape
    Dh = E // n_heads
    xn = ln(x, p["g1"], p["b1"])
    q = xn @ p["wq"]
    k = xn @ p["wk"]
    v = xn @ p["wv"]
    q = q.reshape(B, T, n_heads, Dh).transpose(0, 2, 1, 3)
    k = k.reshape(B, T, n_heads, Dh).transpose(0, 2, 1, 3)
    v = v.reshape(B, T, n_heads, Dh).transpose(0, 2, 1, 3)
    s = jnp.einsum("bhqd,bhkd->bhqk", q, k) / (Dh ** 0.5)
    mask = jnp.tril(jnp.ones((T, T), dtype=bool))
    s = jnp.where(mask, s, -1e30)
    a = jax.nn.softmax(s, axis=-1)
    att = jnp.einsum("bhqk,bhkd->bhqd", a, v).transpose(0, 2, 1, 3).reshape(B, T, E)
    att = att @ p["wo"] + p["bo"]
    y = xn + att
    yn = ln(y, p["g2"], p["b2"])
    ff = jnp.maximum(yn @ p["w1"] + p["bf1"], 0.0) @ p["w2"] + p["bf2"]
    return yn + ff


# --------------------------------------------------------------------------- #
# Main
# --------------------------------------------------------------------------- #
def init_params(key, emb_dim, ffw_upscale_factor):
    E = emb_dim
    F = ffw_upscale_factor * E
    ks = jax.random.split(key, 8)
    std = 0.02
    # Weight matrices stored as (in_features, out_features).
    return {
        "g1": jnp.ones((1, E), jnp.float32),
        "b1": jnp.zeros((1, E), jnp.float32),
        "wq": std * jax.random.normal(ks[0], (E, E), jnp.float32),
        "wk": std * jax.random.normal(ks[1], (E, E), jnp.float32),
        "wv": std * jax.random.normal(ks[2], (E, E), jnp.float32),
        "wo": std * jax.random.normal(ks[3], (E, E), jnp.float32),
        "bo": std * jax.random.normal(ks[4], (1, E), jnp.float32),
        "g2": jnp.ones((1, E), jnp.float32),
        "b2": jnp.zeros((1, E), jnp.float32),
        "w1": std * jax.random.normal(ks[5], (E, F), jnp.float32),
        "bf1": std * jax.random.normal(ks[6], (1, F), jnp.float32),
        "w2": std * jax.random.normal(ks[7], (F, E), jnp.float32),
        "bf2": jnp.zeros((1, E), jnp.float32),
    }


if __name__ == "__main__":
    # Small synthetic config consistent with the module's forward.
    B = 2              # batch
    block_size = 8     # T (sequence length == block_size)
    n_att_heads = 4
    emb_dim = 32
    ffw_upscale_factor = 4
    # dropout is identity at inference.

    key = jax.random.PRNGKey(0)
    k_x, k_p = jax.random.split(key)
    x = jax.random.normal(k_x, (B, block_size, emb_dim), jnp.float32)
    params = init_params(k_p, emb_dim, ffw_upscale_factor)

    out = decoder_block(x, params, n_att_heads)
    out = jax.block_until_ready(out)

    ref = decoder_block_ref(x, params, n_att_heads)
    assert out.shape == (B, block_size, emb_dim)
    # bf16 MXU operands + approx softmax reciprocal vs. an f32 reference:
    # expected error is a few 1e-3; compare with a correspondingly loose tol.
    max_err = float(jnp.max(jnp.abs(out - ref)))
    assert jnp.allclose(out, ref, atol=2e-2, rtol=2e-2), f"mismatch vs ref (max err {max_err})"

    print("KERNEL_OK")
</pallas_src>

<mosaic_0001>
module attributes {stable_mosaic.version = 11 : i64} {
  func.func @_decoder_block_kernel(%arg0: i32, %arg1: memref<16x32xf32, #tpu.memory_space<vmem>>, %arg2: memref<1x32xf32, #tpu.memory_space<vmem>>, %arg3: memref<1x32xf32, #tpu.memory_space<vmem>>, %arg4: memref<32x96xbf16, #tpu.memory_space<vmem>>, %arg5: memref<32x32xbf16, #tpu.memory_space<vmem>>, %arg6: memref<1x32xf32, #tpu.memory_space<vmem>>, %arg7: memref<1x32xf32, #tpu.memory_space<vmem>>, %arg8: memref<1x32xf32, #tpu.memory_space<vmem>>, %arg9: memref<32x128xbf16, #tpu.memory_space<vmem>>, %arg10: memref<1x128xf32, #tpu.memory_space<vmem>>, %arg11: memref<128x32xbf16, #tpu.memory_space<vmem>>, %arg12: memref<1x32xf32, #tpu.memory_space<vmem>>, %arg13: memref<16x32xf32, #tpu.memory_space<vmem>>) attributes {dimension_semantics = [#tpu.dimension_semantics<parallel>], iteration_bounds = array<i64: 1>, scalar_prefetch = 0 : i64, scratch_operands = 0 : i64, tpu.core_type = #tpu.core_type<tc>, window_params = [{transform_indices = @transform_0, window_bounds = array<i64: 16, 32>}, {pipeline_mode = #tpu.pipeline_mode<synchronous>, transform_indices = @transform_1, window_bounds = array<i64: 1, 32>}, {pipeline_mode = #tpu.pipeline_mode<synchronous>, transform_indices = @transform_2, window_bounds = array<i64: 1, 32>}, {pipeline_mode = #tpu.pipeline_mode<synchronous>, transform_indices = @transform_3, window_bounds = array<i64: 32, 96>}, {pipeline_mode = #tpu.pipeline_mode<synchronous>, transform_indices = @transform_4, window_bounds = array<i64: 32, 32>}, {pipeline_mode = #tpu.pipeline_mode<synchronous>, transform_indices = @transform_5, window_bounds = array<i64: 1, 32>}, {pipeline_mode = #tpu.pipeline_mode<synchronous>, transform_indices = @transform_6, window_bounds = array<i64: 1, 32>}, {pipeline_mode = #tpu.pipeline_mode<synchronous>, transform_indices = @transform_7, window_bounds = array<i64: 1, 32>}, {pipeline_mode = #tpu.pipeline_mode<synchronous>, transform_indices = @transform_8, window_bounds = array<i64: 32, 128>}, {pipeline_mode = #tpu.pipeline_mode<synchronous>, transform_indices = @transform_9, window_bounds = array<i64: 1, 128>}, {pipeline_mode = #tpu.pipeline_mode<synchronous>, transform_indices = @transform_10, window_bounds = array<i64: 128, 32>}, {pipeline_mode = #tpu.pipeline_mode<synchronous>, transform_indices = @transform_11, window_bounds = array<i64: 1, 32>}, {transform_indices = @transform_12, window_bounds = array<i64: 16, 32>}]} {
    %c0 = arith.constant 0 : index
    %c0_0 = arith.constant 0 : index
    %0 = vector.load %arg1[%c0, %c0_0] : memref<16x32xf32, #tpu.memory_space<vmem>>, vector<16x32xf32>
    %c0_1 = arith.constant 0 : index
    %c0_2 = arith.constant 0 : index
    %1 = vector.load %arg2[%c0_1, %c0_2] : memref<1x32xf32, #tpu.memory_space<vmem>>, vector<1x32xf32>
    %c0_3 = arith.constant 0 : index
    %c0_4 = arith.constant 0 : index
    %2 = vector.load %arg3[%c0_3, %c0_4] : memref<1x32xf32, #tpu.memory_space<vmem>>, vector<1x32xf32>
    %cst = arith.constant dense<0.000000e+00> : vector<16xf32>
    %3 = vector.multi_reduction <add>, %0, %cst [1] : vector<16x32xf32> to vector<16xf32>
    %4 = vector.shape_cast %3 : vector<16xf32> to vector<16x1xf32>
    %cst_5 = arith.constant 3.200000e+01 : f32
    %5 = vector.broadcast %cst_5 : f32 to vector<16x1xf32>
    %6 = arith.divf %4, %5 : vector<16x1xf32>
    %7 = vector.broadcast %6 : vector<16x1xf32> to vector<16x32xf32>
    %8 = arith.subf %0, %7 : vector<16x32xf32>
    %9 = arith.mulf %8, %8 : vector<16x32xf32>
    %cst_6 = arith.constant dense<0.000000e+00> : vector<16xf32>
    %10 = vector.multi_reduction <add>, %9, %cst_6 [1] : vector<16x32xf32> to vector<16xf32>
    %11 = vector.shape_cast %10 : vector<16xf32> to vector<16x1xf32>
    %cst_7 = arith.constant 3.200000e+01 : f32
    %12 = vector.broadcast %cst_7 : f32 to vector<16x1xf32>
    %13 = arith.divf %11, %12 : vector<16x1xf32>
    %14 = vector.broadcast %6 : vector<16x1xf32> to vector<16x32xf32>
    %15 = arith.subf %0, %14 : vector<16x32xf32>
    %cst_8 = arith.constant 9.99999974E-6 : f32
    %16 = vector.broadcast %cst_8 : f32 to vector<16x1xf32>
    %17 = arith.addf %13, %16 : vector<16x1xf32>
    %18 = math.rsqrt %17 : vector<16x1xf32>
    %19 = vector.broadcast %18 : vector<16x1xf32> to vector<16x32xf32>
    %20 = arith.mulf %15, %19 : vector<16x32xf32>
    %21 = vector.broadcast %1 : vector<1x32xf32> to vector<16x32xf32>
    %22 = arith.mulf %20, %21 : vector<16x32xf32>
    %23 = vector.broadcast %2 : vector<1x32xf32> to vector<16x32xf32>
    %24 = arith.addf %22, %23 : vector<16x32xf32>
    %25 = arith.truncf %24 : vector<16x32xf32> to vector<16x32xbf16>
    %c0_9 = arith.constant 0 : index
    %c0_10 = arith.constant 0 : index
    %26 = vector.load %arg4[%c0_9, %c0_10] : memref<32x96xbf16, #tpu.memory_space<vmem>>, vector<32x96xbf16>
    %cst_11 = arith.constant dense<0.000000e+00> : vector<16x96xf32>
    %27 = tpu.matmul %25, %26, %cst_11 {dimension_numbers = #tpu.dot_dimension_numbers<[1], [0], [0], [1], [0, 0, 1, 1], [], []>} : vector<16x32xbf16>, vector<32x96xbf16>, vector<16x96xf32> -> vector<16x96xf32>
    %28 = tpu.iota {dimensions = array<i32: 0>} : vector<8x8xi32>
    %29 = tpu.iota {dimensions = array<i32: 1>} : vector<8x8xi32>
    %30 = arith.cmpi sge, %28, %29 : vector<8x8xi32>
    %31 = vector.shape_cast %30 : vector<8x8xi1> to vector<1x8x8xi1>
    %32 = vector.extract_strided_slice %27 {offsets = [0, 0], sizes = [16, 8], strides = [1, 1]} : vector<16x96xf32> to vector<16x8xf32>
    %cst_12 = arith.constant 0.353553385 : f32
    %33 = vector.broadcast %cst_12 : f32 to vector<16x8xf32>
    %34 = arith.mulf %32, %33 : vector<16x8xf32>
    %35 = vector.extract_strided_slice %27 {offsets = [0, 32], sizes = [16, 8], strides = [1, 1]} : vector<16x96xf32> to vector<16x8xf32>
    %36 = vector.extract_strided_slice %27 {offsets = [0, 64], sizes = [16, 8], strides = [1, 1]} : vector<16x96xf32> to vector<16x8xf32>
    %37 = vector.shape_cast %34 : vector<16x8xf32> to vector<2x8x8xf32>
    %38 = arith.truncf %37 : vector<2x8x8xf32> to vector<2x8x8xbf16>
    %39 = vector.shape_cast %35 : vector<16x8xf32> to vector<2x8x8xf32>
    %40 = arith.truncf %39 : vector<2x8x8xf32> to vector<2x8x8xbf16>
    %41 = vector.shape_cast %36 : vector<16x8xf32> to vector<2x8x8xf32>
    %42 = arith.truncf %41 : vector<2x8x8xf32> to vector<2x8x8xbf16>
    "tpu.trace_start"() <{level = 10 : i32, message = "bqd,bkd->bqk"}> : () -> ()
    %cst_13 = arith.constant dense<0.000000e+00> : vector<2x8x8xf32>
    %43 = tpu.matmul %38, %40, %cst_13 {dimension_numbers = #tpu.dot_dimension_numbers<[2], [2], [1], [1], [0, 0, 0, 1, 1, 1], [0], [0]>} : vector<2x8x8xbf16>, vector<2x8x8xbf16>, vector<2x8x8xf32> -> vector<2x8x8xf32>
    %cst_14 = arith.constant -1.000000e+30 : f32
    "tpu.trace_stop"() : () -> ()
    %44 = vector.shape_cast %31 : vector<1x8x8xi1> to vector<1x8x8xi1>
    %45 = vector.broadcast %44 : vector<1x8x8xi1> to vector<2x8x8xi1>
    %46 = vector.broadcast %cst_14 : f32 to vector<2x8x8xf32>
    %47 = arith.select %45, %43, %46 : vector<2x8x8xi1>, vector<2x8x8xf32>
    %cst_15 = arith.constant dense<0xFF800000> : vector<2x8xf32>
    %48 = vector.multi_reduction <maximumf>, %47, %cst_15 [2] : vector<2x8x8xf32> to vector<2x8xf32>
    %49 = vector.shape_cast %48 : vector<2x8xf32> to vector<2x8x1xf32>
    %50 = vector.broadcast %49 : vector<2x8x1xf32> to vector<2x8x8xf32>
    %51 = arith.subf %47, %50 : vector<2x8x8xf32>
    %52 = math.exp %51 : vector<2x8x8xf32>
    %cst_16 = arith.constant dense<0.000000e+00> : vector<2x8xf32>
    %53 = vector.multi_reduction <add>, %52, %cst_16 [2] : vector<2x8x8xf32> to vector<2x8xf32>
    %54 = vector.shape_cast %53 : vector<2x8xf32> to vector<2x8x1xf32>
    %55 = tpu.reciprocal %54 {approx = true} : vector<2x8x1xf32> -> vector<2x8x1xf32>
    %56 = vector.broadcast %55 : vector<2x8x1xf32> to vector<2x8x8xf32>
    %57 = arith.mulf %52, %56 : vector<2x8x8xf32>
    %58 = arith.truncf %57 : vector<2x8x8xf32> to vector<2x8x8xbf16>
    "tpu.trace_start"() <{level = 10 : i32, message = "bqk,bkd->bqd"}> : () -> ()
    %cst_17 = arith.constant dense<0.000000e+00> : vector<2x8x8xf32>
    %59 = tpu.matmul %58, %42, %cst_17 {dimension_numbers = #tpu.dot_dimension_numbers<[2], [1], [1], [2], [0, 0, 0, 1, 1, 2], [0], [0]>} : vector<2x8x8xbf16>, vector<2x8x8xbf16>, vector<2x8x8xf32> -> vector<2x8x8xf32>
    "tpu.trace_stop"() : () -> ()
    %60 = vector.shape_cast %59 : vector<2x8x8xf32> to vector<16x8xf32>
    %61 = vector.extract_strided_slice %27 {offsets = [0, 8], sizes = [16, 8], strides = [1, 1]} : vector<16x96xf32> to vector<16x8xf32>
    %cst_18 = arith.constant 0.353553385 : f32
    %62 = vector.broadcast %cst_18 : f32 to vector<16x8xf32>
    %63 = arith.mulf %61, %62 : vector<16x8xf32>
    %64 = vector.extract_strided_slice %27 {offsets = [0, 40], sizes = [16, 8], strides = [1, 1]} : vector<16x96xf32> to vector<16x8xf32>
    %65 = vector.extract_strided_slice %27 {offsets = [0, 72], sizes = [16, 8], strides = [1, 1]} : vector<16x96xf32> to vector<16x8xf32>
    %66 = vector.shape_cast %63 : vector<16x8xf32> to vector<2x8x8xf32>
    %67 = arith.truncf %66 : vector<2x8x8xf32> to vector<2x8x8xbf16>
    %68 = vector.shape_cast %64 : vector<16x8xf32> to vector<2x8x8xf32>
    %69 = arith.truncf %68 : vector<2x8x8xf32> to vector<2x8x8xbf16>
    %70 = vector.shape_cast %65 : vector<16x8xf32> to vector<2x8x8xf32>
    %71 = arith.truncf %70 : vector<2x8x8xf32> to vector<2x8x8xbf16>
    "tpu.trace_start"() <{level = 10 : i32, message = "bqd,bkd->bqk"}> : () -> ()
    %cst_19 = arith.constant dense<0.000000e+00> : vector<2x8x8xf32>
    %72 = tpu.matmul %67, %69, %cst_19 {dimension_numbers = #tpu.dot_dimension_numbers<[2], [2], [1], [1], [0, 0, 0, 1, 1, 1], [0], [0]>} : vector<2x8x8xbf16>, vector<2x8x8xbf16>, vector<2x8x8xf32> -> vector<2x8x8xf32>
    %cst_20 = arith.constant -1.000000e+30 : f32
    "tpu.trace_stop"() : () -> ()
    %73 = vector.shape_cast %31 : vector<1x8x8xi1> to vector<1x8x8xi1>
    %74 = vector.broadcast %73 : vector<1x8x8xi1> to vector<2x8x8xi1>
    %75 = vector.broadcast %cst_20 : f32 to vector<2x8x8xf32>
    %76 = arith.select %74, %72, %75 : vector<2x8x8xi1>, vector<2x8x8xf32>
    %cst_21 = arith.constant dense<0xFF800000> : vector<2x8xf32>
    %77 = vector.multi_reduction <maximumf>, %76, %cst_21 [2] : vector<2x8x8xf32> to vector<2x8xf32>
    %78 = vector.shape_cast %77 : vector<2x8xf32> to vector<2x8x1xf32>
    %79 = vector.broadcast %78 : vector<2x8x1xf32> to vector<2x8x8xf32>
    %80 = arith.subf %76, %79 : vector<2x8x8xf32>
    %81 = math.exp %80 : vector<2x8x8xf32>
    %cst_22 = arith.constant dense<0.000000e+00> : vector<2x8xf32>
    %82 = vector.multi_reduction <add>, %81, %cst_22 [2] : vector<2x8x8xf32> to vector<2x8xf32>
    %83 = vector.shape_cast %82 : vector<2x8xf32> to vector<2x8x1xf32>
    %84 = tpu.reciprocal %83 {approx = true} : vector<2x8x1xf32> -> vector<2x8x1xf32>
    %85 = vector.broadcast %84 : vector<2x8x1xf32> to vector<2x8x8xf32>
    %86 = arith.mulf %81, %85 : vector<2x8x8xf32>
    %87 = arith.truncf %86 : vector<2x8x8xf32> to vector<2x8x8xbf16>
    "tpu.trace_start"() <{level = 10 : i32, message = "bqk,bkd->bqd"}> : () -> ()
    %cst_23 = arith.constant dense<0.000000e+00> : vector<2x8x8xf32>
    %88 = tpu.matmul %87, %71, %cst_23 {dimension_numbers = #tpu.dot_dimension_numbers<[2], [1], [1], [2], [0, 0, 0, 1, 1, 2], [0], [0]>} : vector<2x8x8xbf16>, vector<2x8x8xbf16>, vector<2x8x8xf32> -> vector<2x8x8xf32>
    "tpu.trace_stop"() : () -> ()
    %89 = vector.shape_cast %88 : vector<2x8x8xf32> to vector<16x8xf32>
    %90 = vector.extract_strided_slice %27 {offsets = [0, 16], sizes = [16, 8], strides = [1, 1]} : vector<16x96xf32> to vector<16x8xf32>
    %cst_24 = arith.constant 0.353553385 : f32
    %91 = vector.broadcast %cst_24 : f32 to vector<16x8xf32>
    %92 = arith.mulf %90, %91 : vector<16x8xf32>
    %93 = vector.extract_strided_slice %27 {offsets = [0, 48], sizes = [16, 8], strides = [1, 1]} : vector<16x96xf32> to vector<16x8xf32>
    %94 = vector.extract_strided_slice %27 {offsets = [0, 80], sizes = [16, 8], strides = [1, 1]} : vector<16x96xf32> to vector<16x8xf32>
    %95 = vector.shape_cast %92 : vector<16x8xf32> to vector<2x8x8xf32>
    %96 = arith.truncf %95 : vector<2x8x8xf32> to vector<2x8x8xbf16>
    %97 = vector.shape_cast %93 : vector<16x8xf32> to vector<2x8x8xf32>
    %98 = arith.truncf %97 : vector<2x8x8xf32> to vector<2x8x8xbf16>
    %99 = vector.shape_cast %94 : vector<16x8xf32> to vector<2x8x8xf32>
    %100 = arith.truncf %99 : vector<2x8x8xf32> to vector<2x8x8xbf16>
    "tpu.trace_start"() <{level = 10 : i32, message = "bqd,bkd->bqk"}> : () -> ()
    %cst_25 = arith.constant dense<0.000000e+00> : vector<2x8x8xf32>
    %101 = tpu.matmul %96, %98, %cst_25 {dimension_numbers = #tpu.dot_dimension_numbers<[2], [2], [1], [1], [0, 0, 0, 1, 1, 1], [0], [0]>} : vector<2x8x8xbf16>, vector<2x8x8xbf16>, vector<2x8x8xf32> -> vector<2x8x8xf32>
    %cst_26 = arith.constant -1.000000e+30 : f32
    "tpu.trace_stop"() : () -> ()
    %102 = vector.shape_cast %31 : vector<1x8x8xi1> to vector<1x8x8xi1>
    %103 = vector.broadcast %102 : vector<1x8x8xi1> to vector<2x8x8xi1>
    %104 = vector.broadcast %cst_26 : f32 to vector<2x8x8xf32>
    %105 = arith.select %103, %101, %104 : vector<2x8x8xi1>, vector<2x8x8xf32>
    %cst_27 = arith.constant dense<0xFF800000> : vector<2x8xf32>
    %106 = vector.multi_reduction <maximumf>, %105, %cst_27 [2] : vector<2x8x8xf32> to vector<2x8xf32>
    %107 = vector.shape_cast %106 : vector<2x8xf32> to vector<2x8x1xf32>
    %108 = vector.broadcast %107 : vector<2x8x1xf32> to vector<2x8x8xf32>
    %109 = arith.subf %105, %108 : vector<2x8x8xf32>
    %110 = math.exp %109 : vector<2x8x8xf32>
    %cst_28 = arith.constant dense<0.000000e+00> : vector<2x8xf32>
    %111 = vector.multi_reduction <add>, %110, %cst_28 [2] : vector<2x8x8xf32> to vector<2x8xf32>
    %112 = vector.shape_cast %111 : vector<2x8xf32> to vector<2x8x1xf32>
    %113 = tpu.reciprocal %112 {approx = true} : vector<2x8x1xf32> -> vector<2x8x1xf32>
    %114 = vector.broadcast %113 : vector<2x8x1xf32> to vector<2x8x8xf32>
    %115 = arith.mulf %110, %114 : vector<2x8x8xf32>
    %116 = arith.truncf %115 : vector<2x8x8xf32> to vector<2x8x8xbf16>
    "tpu.trace_start"() <{level = 10 : i32, message = "bqk,bkd->bqd"}> : () -> ()
    %cst_29 = arith.constant dense<0.000000e+00> : vector<2x8x8xf32>
    %117 = tpu.matmul %116, %100, %cst_29 {dimension_numbers = #tpu.dot_dimension_numbers<[2], [1], [1], [2], [0, 0, 0, 1, 1, 2], [0], [0]>} : vector<2x8x8xbf16>, vector<2x8x8xbf16>, vector<2x8x8xf32> -> vector<2x8x8xf32>
    "tpu.trace_stop"() : () -> ()
    %118 = vector.shape_cast %117 : vector<2x8x8xf32> to vector<16x8xf32>
    %119 = vector.extract_strided_slice %27 {offsets = [0, 24], sizes = [16, 8], strides = [1, 1]} : vector<16x96xf32> to vector<16x8xf32>
    %cst_30 = arith.constant 0.353553385 : f32
    %120 = vector.broadcast %cst_30 : f32 to vector<16x8xf32>
    %121 = arith.mulf %119, %120 : vector<16x8xf32>
    %122 = vector.extract_strided_slice %27 {offsets = [0, 56], sizes = [16, 8], strides = [1, 1]} : vector<16x96xf32> to vector<16x8xf32>
    %123 = vector.extract_strided_slice %27 {offsets = [0, 88], sizes = [16, 8], strides = [1, 1]} : vector<16x96xf32> to vector<16x8xf32>
    %124 = vector.shape_cast %121 : vector<16x8xf32> to vector<2x8x8xf32>
    %125 = arith.truncf %124 : vector<2x8x8xf32> to vector<2x8x8xbf16>
    %126 = vector.shape_cast %122 : vector<16x8xf32> to vector<2x8x8xf32>
    %127 = arith.truncf %126 : vector<2x8x8xf32> to vector<2x8x8xbf16>
    %128 = vector.shape_cast %123 : vector<16x8xf32> to vector<2x8x8xf32>
    %129 = arith.truncf %128 : vector<2x8x8xf32> to vector<2x8x8xbf16>
    "tpu.trace_start"() <{level = 10 : i32, message = "bqd,bkd->bqk"}> : () -> ()
    %cst_31 = arith.constant dense<0.000000e+00> : vector<2x8x8xf32>
    %130 = tpu.matmul %125, %127, %cst_31 {dimension_numbers = #tpu.dot_dimension_numbers<[2], [2], [1], [1], [0, 0, 0, 1, 1, 1], [0], [0]>} : vector<2x8x8xbf16>, vector<2x8x8xbf16>, vector<2x8x8xf32> -> vector<2x8x8xf32>
    %cst_32 = arith.constant -1.000000e+30 : f32
    "tpu.trace_stop"() : () -> ()
    %131 = vector.shape_cast %31 : vector<1x8x8xi1> to vector<1x8x8xi1>
    %132 = vector.broadcast %131 : vector<1x8x8xi1> to vector<2x8x8xi1>
    %133 = vector.broadcast %cst_32 : f32 to vector<2x8x8xf32>
    %134 = arith.select %132, %130, %133 : vector<2x8x8xi1>, vector<2x8x8xf32>
    %cst_33 = arith.constant dense<0xFF800000> : vector<2x8xf32>
    %135 = vector.multi_reduction <maximumf>, %134, %cst_33 [2] : vector<2x8x8xf32> to vector<2x8xf32>
    %136 = vector.shape_cast %135 : vector<2x8xf32> to vector<2x8x1xf32>
    %137 = vector.broadcast %136 : vector<2x8x1xf32> to vector<2x8x8xf32>
    %138 = arith.subf %134, %137 : vector<2x8x8xf32>
    %139 = math.exp %138 : vector<2x8x8xf32>
    %cst_34 = arith.constant dense<0.000000e+00> : vector<2x8xf32>
    %140 = vector.multi_reduction <add>, %139, %cst_34 [2] : vector<2x8x8xf32> to vector<2x8xf32>
    %141 = vector.shape_cast %140 : vector<2x8xf32> to vector<2x8x1xf32>
    %142 = tpu.reciprocal %141 {approx = true} : vector<2x8x1xf32> -> vector<2x8x1xf32>
    %143 = vector.broadcast %142 : vector<2x8x1xf32> to vector<2x8x8xf32>
    %144 = arith.mulf %139, %143 : vector<2x8x8xf32>
    %145 = arith.truncf %144 : vector<2x8x8xf32> to vector<2x8x8xbf16>
    "tpu.trace_start"() <{level = 10 : i32, message = "bqk,bkd->bqd"}> : () -> ()
    %cst_35 = arith.constant dense<0.000000e+00> : vector<2x8x8xf32>
    %146 = tpu.matmul %145, %129, %cst_35 {dimension_numbers = #tpu.dot_dimension_numbers<[2], [1], [1], [2], [0, 0, 0, 1, 1, 2], [0], [0]>} : vector<2x8x8xbf16>, vector<2x8x8xbf16>, vector<2x8x8xf32> -> vector<2x8x8xf32>
    "tpu.trace_stop"() : () -> ()
    %147 = vector.shape_cast %146 : vector<2x8x8xf32> to vector<16x8xf32>
    %148 = tpu.concatenate %60, %89, %118, %147 in 1 : vector<16x8xf32>, vector<16x8xf32>, vector<16x8xf32>, vector<16x8xf32> -> vector<16x32xf32>
    %149 = arith.truncf %148 : vector<16x32xf32> to vector<16x32xbf16>
    %c0_36 = arith.constant 0 : index
    %c0_37 = arith.constant 0 : index
    %150 = vector.load %arg5[%c0_36, %c0_37] : memref<32x32xbf16, #tpu.memory_space<vmem>>, vector<32x32xbf16>
    %cst_38 = arith.constant dense<0.000000e+00> : vector<16x32xf32>
    %151 = tpu.matmul %149, %150, %cst_38 {dimension_numbers = #tpu.dot_dimension_numbers<[1], [0], [0], [1], [0, 0, 1, 1], [], []>} : vector<16x32xbf16>, vector<32x32xbf16>, vector<16x32xf32> -> vector<16x32xf32>
    %c0_39 = arith.constant 0 : index
    %c0_40 = arith.constant 0 : index
    %152 = vector.load %arg6[%c0_39, %c0_40] : memref<1x32xf32, #tpu.memory_space<vmem>>, vector<1x32xf32>
    %153 = vector.broadcast %152 : vector<1x32xf32> to vector<16x32xf32>
    %154 = arith.addf %151, %153 : vector<16x32xf32>
    %155 = arith.addf %24, %154 : vector<16x32xf32>
    %c0_41 = arith.constant 0 : index
    %c0_42 = arith.constant 0 : index
    %156 = vector.load %arg7[%c0_41, %c0_42] : memref<1x32xf32, #tpu.memory_space<vmem>>, vector<1x32xf32>
    %c0_43 = arith.constant 0 : index
    %c0_44 = arith.constant 0 : index
    %157 = vector.load %arg8[%c0_43, %c0_44] : memref<1x32xf32, #tpu.memory_space<vmem>>, vector<1x32xf32>
    %cst_45 = arith.constant dense<0.000000e+00> : vector<16xf32>
    %158 = vector.multi_reduction <add>, %155, %cst_45 [1] : vector<16x32xf32> to vector<16xf32>
    %159 = vector.shape_cast %158 : vector<16xf32> to vector<16x1xf32>
    %cst_46 = arith.constant 3.200000e+01 : f32
    %160 = vector.broadcast %cst_46 : f32 to vector<16x1xf32>
    %161 = arith.divf %159, %160 : vector<16x1xf32>
    %162 = vector.broadcast %161 : vector<16x1xf32> to vector<16x32xf32>
    %163 = arith.subf %155, %162 : vector<16x32xf32>
    %164 = arith.mulf %163, %163 : vector<16x32xf32>
    %cst_47 = arith.constant dense<0.000000e+00> : vector<16xf32>
    %165 = vector.multi_reduction <add>, %164, %cst_47 [1] : vector<16x32xf32> to vector<16xf32>
    %166 = vector.shape_cast %165 : vector<16xf32> to vector<16x1xf32>
    %cst_48 = arith.constant 3.200000e+01 : f32
    %167 = vector.broadcast %cst_48 : f32 to vector<16x1xf32>
    %168 = arith.divf %166, %167 : vector<16x1xf32>
    %169 = vector.broadcast %161 : vector<16x1xf32> to vector<16x32xf32>
    %170 = arith.subf %155, %169 : vector<16x32xf32>
    %cst_49 = arith.constant 9.99999974E-6 : f32
    %171 = vector.broadcast %cst_49 : f32 to vector<16x1xf32>
    %172 = arith.addf %168, %171 : vector<16x1xf32>
    %173 = math.rsqrt %172 : vector<16x1xf32>
    %174 = vector.broadcast %173 : vector<16x1xf32> to vector<16x32xf32>
    %175 = arith.mulf %170, %174 : vector<16x32xf32>
    %176 = vector.broadcast %156 : vector<1x32xf32> to vector<16x32xf32>
    %177 = arith.mulf %175, %176 : vector<16x32xf32>
    %178 = vector.broadcast %157 : vector<1x32xf32> to vector<16x32xf32>
    %179 = arith.addf %177, %178 : vector<16x32xf32>
    %180 = arith.truncf %179 : vector<16x32xf32> to vector<16x32xbf16>
    %c0_50 = arith.constant 0 : index
    %c0_51 = arith.constant 0 : index
    %181 = vector.load %arg9[%c0_50, %c0_51] : memref<32x128xbf16, #tpu.memory_space<vmem>>, vector<32x128xbf16>
    %cst_52 = arith.constant dense<0.000000e+00> : vector<16x128xf32>
    %182 = tpu.matmul %180, %181, %cst_52 {dimension_numbers = #tpu.dot_dimension_numbers<[1], [0], [0], [1], [0, 0, 1, 1], [], []>} : vector<16x32xbf16>, vector<32x128xbf16>, vector<16x128xf32> -> vector<16x128xf32>
    %c0_53 = arith.constant 0 : index
    %c0_54 = arith.constant 0 : index
    %183 = vector.load %arg10[%c0_53, %c0_54] : memref<1x128xf32, #tpu.memory_space<vmem>>, vector<1x128xf32>
    %184 = vector.broadcast %183 : vector<1x128xf32> to vector<16x128xf32>
    %185 = arith.addf %182, %184 : vector<16x128xf32>
    %cst_55 = arith.constant 0.000000e+00 : f32
    %186 = vector.broadcast %cst_55 : f32 to vector<16x128xf32>
    %187 = arith.maximumf %185, %186 : vector<16x128xf32>
    %188 = arith.truncf %187 : vector<16x128xf32> to vector<16x128xbf16>
    %c0_56 = arith.constant 0 : index
    %c0_57 = arith.constant 0 : index
    %189 = vector.load %arg11[%c0_56, %c0_57] : memref<128x32xbf16, #tpu.memory_space<vmem>>, vector<128x32xbf16>
    %cst_58 = arith.constant dense<0.000000e+00> : vector<16x32xf32>
    %190 = tpu.matmul %188, %189, %cst_58 {dimension_numbers = #tpu.dot_dimension_numbers<[1], [0], [0], [1], [0, 0, 1, 1], [], []>} : vector<16x128xbf16>, vector<128x32xbf16>, vector<16x32xf32> -> vector<16x32xf32>
    %c0_59 = arith.constant 0 : index
    %c0_60 = arith.constant 0 : index
    %191 = vector.load %arg12[%c0_59, %c0_60] : memref<1x32xf32, #tpu.memory_space<vmem>>, vector<1x32xf32>
    %192 = vector.broadcast %191 : vector<1x32xf32> to vector<16x32xf32>
    %193 = arith.addf %190, %192 : vector<16x32xf32>
    %194 = arith.addf %179, %193 : vector<16x32xf32>
    %c0_61 = arith.constant 0 : index
    %c0_62 = arith.constant 0 : index
    %195 = vector.load %arg13[%c0_61, %c0_62] : memref<16x32xf32, #tpu.memory_space<vmem>>, vector<16x32xf32>
    tpu.vector_store %arg13[%c0_61, %c0_62], %194 {strides = array<i32>} : memref<16x32xf32, #tpu.memory_space<vmem>>, vector<16x32xf32>,
    return
  }
  func.func @transform_0(%arg0: i32) -> (i32, i32) {
    %c0_i32 = arith.constant 0 : i32
    %c0_i32_0 = arith.constant 0 : i32
    return %arg0, %c0_i32 : i32, i32
  }
  func.func @transform_1(%arg0: i32) -> (i32, i32) {
    %c0_i32 = arith.constant 0 : i32
    %c0_i32_0 = arith.constant 0 : i32
    %c0_i32_1 = arith.constant 0 : i32
    return %c0_i32, %c0_i32_0 : i32, i32
  }
  func.func @transform_2(%arg0: i32) -> (i32, i32) {
    %c0_i32 = arith.constant 0 : i32
    %c0_i32_0 = arith.constant 0 : i32
    %c0_i32_1 = arith.constant 0 : i32
    return %c0_i32, %c0_i32_0 : i32, i32
  }
  func.func @transform_3(%arg0: i32) -> (i32, i32) {
    %c0_i32 = arith.constant 0 : i32
    %c0_i32_0 = arith.constant 0 : i32
    %c0_i32_1 = arith.constant 0 : i32
    return %c0_i32, %c0_i32_0 : i32, i32
  }
  func.func @transform_4(%arg0: i32) -> (i32, i32) {
    %c0_i32 = arith.constant 0 : i32
    %c0_i32_0 = arith.constant 0 : i32
    %c0_i32_1 = arith.constant 0 : i32
    return %c0_i32, %c0_i32_0 : i32, i32
  }
  func.func @transform_5(%arg0: i32) -> (i32, i32) {
    %c0_i32 = arith.constant 0 : i32
    %c0_i32_0 = arith.constant 0 : i32
    %c0_i32_1 = arith.constant 0 : i32
    return %c0_i32, %c0_i32_0 : i32, i32
  }
  func.func @transform_6(%arg0: i32) -> (i32, i32) {
    %c0_i32 = arith.constant 0 : i32
    %c0_i32_0 = arith.constant 0 : i32
    %c0_i32_1 = arith.constant 0 : i32
    return %c0_i32, %c0_i32_0 : i32, i32
  }
  func.func @transform_7(%arg0: i32) -> (i32, i32) {
    %c0_i32 = arith.constant 0 : i32
    %c0_i32_0 = arith.constant 0 : i32
    %c0_i32_1 = arith.constant 0 : i32
    return %c0_i32, %c0_i32_0 : i32, i32
  }
  func.func @transform_8(%arg0: i32) -> (i32, i32) {
    %c0_i32 = arith.constant 0 : i32
    %c0_i32_0 = arith.constant 0 : i32
    %c0_i32_1 = arith.constant 0 : i32
    return %c0_i32, %c0_i32_0 : i32, i32
  }
  func.func @transform_9(%arg0: i32) -> (i32, i32) {
    %c0_i32 = arith.constant 0 : i32
    %c0_i32_0 = arith.constant 0 : i32
    %c0_i32_1 = arith.constant 0 : i32
    return %c0_i32, %c0_i32_0 : i32, i32
  }
  func.func @transform_10(%arg0: i32) -> (i32, i32) {
    %c0_i32 = arith.constant 0 : i32
    %c0_i32_0 = arith.constant 0 : i32
    %c0_i32_1 = arith.constant 0 : i32
    return %c0_i32, %c0_i32_0 : i32, i32
  }
  func.func @transform_11(%arg0: i32) -> (i32, i32) {
    %c0_i32 = arith.constant 0 : i32
    %c0_i32_0 = arith.constant 0 : i32
    %c0_i32_1 = arith.constant 0 : i32
    return %c0_i32, %c0_i32_0 : i32, i32
  }
  func.func @transform_12(%arg0: i32) -> (i32, i32) {
    %c0_i32 = arith.constant 0 : i32
    %c0_i32_0 = arith.constant 0 : i32
    return %arg0, %c0_i32 : i32, i32
  }
}

</mosaic_0001>

<llo_original>
// kernel: tpu_custom_call.1
$region0: #{tpu_custom_call.1}
  #allocation0 [shape = 'u32[]', space=smem, size = 0x4, offset = 0x4, fixed_abs, tag = 'smem constant byte address 0x4 - core index']
  #allocation1 [shape = 'u32[72,128]{1,0:T(1,128)}', space=vmem, size = 0x9000, scoped, tag = 'internal scratch']
  %s0 = inlined_call_operand.vmem [shape: f32[16,32], index: 0, kind: input, shape index: {}]
  %s1 = inlined_call_operand.vmem [shape: f32[1,32], index: 1, kind: input, shape index: {}]
  %s2 = inlined_call_operand.vmem [shape: f32[1,32], index: 2, kind: input, shape index: {}]
  %s3 = inlined_call_operand.vmem [shape: bf16[32,96], index: 3, kind: input, shape index: {}]
  %s4 = inlined_call_operand.vmem [shape: bf16[32,32], index: 4, kind: input, shape index: {}]
  %s5 = inlined_call_operand.vmem [shape: f32[1,32], index: 5, kind: input, shape index: {}]
  %s6 = inlined_call_operand.vmem [shape: f32[1,32], index: 6, kind: input, shape index: {}]
  %s7 = inlined_call_operand.vmem [shape: f32[1,32], index: 7, kind: input, shape index: {}]
  %s8 = inlined_call_operand.vmem [shape: bf16[32,128], index: 8, kind: input, shape index: {}]
  %s9 = inlined_call_operand.vmem [shape: f32[1,128], index: 9, kind: input, shape index: {}]
  %s10 = inlined_call_operand.vmem [shape: bf16[128,32], index: 10, kind: input, shape index: {}]
  %s11 = inlined_call_operand.vmem [shape: f32[1,32], index: 11, kind: input, shape index: {}]
  %s12 = inlined_call_operand.hbm [shape: f32[16,32], index: 12, kind: output, shape index: {}]
  %s13 = sld [smem:[#allocation0]]
  $region58: #{tpu_custom_call.1} parent=0
    _
  %s15 = ssub.s32 1, %s13
  %s16 = scalar_select 0, %s15, %s13
  $region1: #{tpu_custom_call.1} parent=0
    #allocation2 [shape = 'u8[8192]{0}', space=vmem, size = 0x2000, scoped, tag = 'output window, operand 0, single buffered']
    #allocation3 [shape = 's32[1]{0}', space=sflag, size = 0x4, scoped, tag = 'scoped memory for tpu_custom_call.1']
    %17 = vsyncpa [#allocation3], 0
    // Predicated region
    $region2: #{tpu_custom_call.1} parent=1 // pred_check
      _
    $region3: #{tpu_custom_call.1} parent=1 // pred_check_branch
      %19 = sbr.rel (0) target = $region5
    $region4: #{tpu_custom_call.1} parent=1 // pred_region
      _
    $region5: #{tpu_custom_call.1} parent=1 // pred_fallthru
      _
    // Predicated region
    $region6: #{tpu_custom_call.1} parent=1 // pred_check
      _
    $region7: #{tpu_custom_call.1} parent=1 // pred_check_branch
      %21 = sbr.rel (0) target = $region9
    $region8: #{tpu_custom_call.1} parent=1 // pred_region
      _
    $region9: #{tpu_custom_call.1} parent=1 // pred_fallthru
      _
    // Predicated region
    $region10: #{tpu_custom_call.1} parent=1 // pred_check
      _
    $region11: #{tpu_custom_call.1} parent=1 // pred_check_branch
      %23 = sbr.rel (0) target = $region13
    $region12: #{tpu_custom_call.1} parent=1 // pred_region
      _
    $region13: #{tpu_custom_call.1} parent=1 // pred_fallthru
      _
    // Predicated region
    $region14: #{tpu_custom_call.1} parent=1 // pred_check
      _
    $region15: #{tpu_custom_call.1} parent=1 // pred_check_branch
      %25 = sbr.rel (0) target = $region17
    $region16: #{tpu_custom_call.1} parent=1 // pred_region
      _
    $region17: #{tpu_custom_call.1} parent=1 // pred_fallthru
      _
    // Predicated region
    $region18: #{tpu_custom_call.1} parent=1 // pred_check
      _
    $region19: #{tpu_custom_call.1} parent=1 // pred_check_branch
      %27 = sbr.rel (0) target = $region21
    $region20: #{tpu_custom_call.1} parent=1 // pred_region
      _
    $region21: #{tpu_custom_call.1} parent=1 // pred_fallthru
      _
    // Predicated region
    $region22: #{tpu_custom_call.1} parent=1 // pred_check
      _
    $region23: #{tpu_custom_call.1} parent=1 // pred_check_branch
      %29 = sbr.rel (0) target = $region25
    $region24: #{tpu_custom_call.1} parent=1 // pred_region
      _
    $region25: #{tpu_custom_call.1} parent=1 // pred_fallthru
      _
    // Predicated region
    $region26: #{tpu_custom_call.1} parent=1 // pred_check
      _
    $region27: #{tpu_custom_call.1} parent=1 // pred_check_branch
      %31 = sbr.rel (0) target = $region29
    $region28: #{tpu_custom_call.1} parent=1 // pred_region
      _
    $region29: #{tpu_custom_call.1} parent=1 // pred_fallthru
      _
    // Predicated region
    $region30: #{tpu_custom_call.1} parent=1 // pred_check
      _
    $region31: #{tpu_custom_call.1} parent=1 // pred_check_branch
      %33 = sbr.rel (0) target = $region33
    $region32: #{tpu_custom_call.1} parent=1 // pred_region
      _
    $region33: #{tpu_custom_call.1} parent=1 // pred_fallthru
      _
    // Predicated region
    $region34: #{tpu_custom_call.1} parent=1 // pred_check
      _
    $region35: #{tpu_custom_call.1} parent=1 // pred_check_branch
      %35 = sbr.rel (0) target = $region37
    $region36: #{tpu_custom_call.1} parent=1 // pred_region
      _
    $region37: #{tpu_custom_call.1} parent=1 // pred_fallthru
      _
    // Predicated region
    $region38: #{tpu_custom_call.1} parent=1 // pred_check
      _
    $region39: #{tpu_custom_call.1} parent=1 // pred_check_branch
      %37 = sbr.rel (0) target = $region41
    $region40: #{tpu_custom_call.1} parent=1 // pred_region
      _
    $region41: #{tpu_custom_call.1} parent=1 // pred_fallthru
      _
    // Predicated region
    $region42: #{tpu_custom_call.1} parent=1 // pred_check
      _
    $region43: #{tpu_custom_call.1} parent=1 // pred_check_branch
      %39 = sbr.rel (0) target = $region45
    $region44: #{tpu_custom_call.1} parent=1 // pred_region
      _
    $region45: #{tpu_custom_call.1} parent=1 // pred_fallthru
      _
    // Predicated region
    $region46: #{tpu_custom_call.1} parent=1 // pred_check
      _
    $region47: #{tpu_custom_call.1} parent=1 // pred_check_branch
      %41 = sbr.rel (0) target = $region49
    $region48: #{tpu_custom_call.1} parent=1 // pred_region
      _
    $region49: #{tpu_custom_call.1} parent=1 // pred_fallthru
      _
    %v43 = vld [vmem:[%s0] sm:$0xff]
    %v44 = vld [vmem:[%s0 + $0x8] sm:$0xff]
    %v45 = vld [vmem:[%s1] sm:$0x1]
    %v46 = vld [vmem:[%s2] sm:$0x1]
    %vm47 = vcmask 261120
    %v48 = vsel %vm47, %v43, 0.0
    %49 = vadd.xlane.f32.xlu0 %v48
    %v50 = vpop.xlane.xlu0 %49
    %v51 = vsel %vm47, %v44, 0.0
    %52 = vadd.xlane.f32.xlu0 %v51
    %v53 = vpop.xlane.xlu0 %52
    %v54 = vrcp.pop 32.0
    %v55 = vmul.f32 32.0, %v54
    %v56 = vsub.f32 1.0, %v55
    %v57 = vmul.f32 %v54, %v56
    %v58 = vadd.f32 %v54, %v57
    %vm59 = vweird.f32 %v54
    %v60 = vsel %vm59, %v54, %v58
    %v61 = vmul.f32 %v50, %v60
    %v62 = vmul.f32 %v53, %v60
    %v63 = vsub.f32 %v43, %v61
    %v64 = vsub.f32 %v44, %v62
    %v65 = vmul.f32 %v63, %v63
    %v66 = vmul.f32 %v64, %v64
    %v67 = vsel %vm47, %v65, 0.0
    %68 = vadd.xlane.f32.xlu0 %v67
    %v69 = vpop.xlane.xlu0 %68
    %v70 = vsel %vm47, %v66, 0.0
    %71 = vadd.xlane.f32.xlu0 %v70
    %v72 = vpop.xlane.xlu0 %71
    %v73 = vmul.f32 %v69, %v60
    %v74 = vmul.f32 %v72, %v60
    %v75 = vadd.f32 %v73, 1e-05
    %v76 = vadd.f32 %v74, 1e-05
    %v77 = vrsqrt.pop %v75
    %v78 = vmul.f32 %v77, %v75
    %v79 = vmul.f32 %v78, %v77
    %v80 = vmul.f32 0.5, %v79
    %v81 = vsub.f32 1.5, %v80
    %v82 = vmul.f32 %v77, %v81
    %vm83 = vweird.f32 %v75
    %vm84 = vweird.f32 %v77
    %vm85 = vmor %vm83, %vm84
    %v86 = vsel %vm85, %v77, %v82
    %v87 = vrsqrt.pop %v76
    %v88 = vmul.f32 %v87, %v76
    %v89 = vmul.f32 %v88, %v87
    %v90 = vmul.f32 0.5, %v89
    %v91 = vsub.f32 1.5, %v90
    %v92 = vmul.f32 %v87, %v91
    %vm93 = vweird.f32 %v76
    %vm94 = vweird.f32 %v87
    %vm95 = vmor %vm93, %vm94
    %v96 = vsel %vm95, %v87, %v92
    %v97 = vmul.f32 %v63, %v86
    %v98 = vmul.f32 %v64, %v96
    %v100 = vperm.slane %v45, 0
    %v102 = vmul.f32 %v97, %v100
    %v103 = vmul.f32 %v98, %v100
    %v105 = vperm.slane %v46, 0
    %v107 = vadd.f32 %v102, %v105
    %v108 = vadd.f32 %v103, %v105
    %v109 = vpack.c.bf16 %v108, %v107
    %v110 = vld [vmem:[%s3] sm:$0xf]
    %v111 = vld [vmem:[%s3 + $0x4] sm:$0xf]
    %v112 = vld [vmem:[%s3 + $0x8] sm:$0xf]
    %v113 = vld [vmem:[%s3 + $0xc] sm:$0xf]
    %v118 = vunpack.c.l.b16 %v110
    %v119 = vunpack.c.l.b16 %v111
    %v120 = vunpack.c.l.b16 %v112
    %v121 = vunpack.c.l.b16 %v113
    %v122 = vpack.c.b16 %v119, %v118
    %v123 = vpack.c.b16 %v121, %v120
    %v127 = vsel %vm47, %v109, 0
    %129 = vmatpush.bf16.msra.mxu0 0
    %130 = vmatpush.bf16.msra.mxu0 0
    %131 = vmatpush.bf16.msra.mxu0 0
    %132 = vmatpush.bf16.msra.mxu0 0
    %133 = vmatpush.bf16.msra.mxu0 0
    %134 = vmatpush.bf16.msra.mxu0 0
    %135 = vmatpush.bf16.msra.mxu0 %v123
    %136 = vmatpush.bf16.msra.mxu0 %v122
    %137 = vmatmul.bf16.gmra.mxu0 %v127
    %v138 = vpop.f32.mrf.mxu0
    %v139 = vadd.f32 0.0, %v138
    %v140 = vpop.f32.mrf.mxu0
    %v141 = vadd.f32 0.0, %v140
    %142 = vdwg.mxu0
    %v143 = vlaneseq
    %v144 = vshrl.u32 %v143, 7
    %v145 = vlaneseq
    %v146 = vand.u32 %v145, 127
    %vm147 = vcmp.ge.s32.totalorder %v144, %v146
    %v148 = vmul.f32 %v139, 0.35355338
    %v149 = vmul.f32 %v141, 0.35355338
    %v150 = vpack.c.bf16 %v148, %v148
    %v151 = vpack.c.bf16 %v149, %v149
    %v152 = vpack.c.bf16 %v139, %v139
    %v153 = vpack.c.bf16 %v141, %v141
    %v155 = vunpack.c.l.b16 %v152
    %v156 = vpack.c.b16 %v155, %v155
    %157 = vrot.lane.b32.xlu0 %v156, 96
    %v158 = vpop.permute.xlu0 %157
    %vm159 = vcmask 64512
    %v161 = vsel %vm159, %v150, 0
    %v164 = vsel %vm159, %v158, 0
    %166 = vmatpush.bf16.xpose.msra.mxu0 0
    %167 = vmatpush.bf16.xpose.msra.mxu0 0
    %168 = vmatpush.bf16.xpose.msra.mxu0 0
    %169 = vmatpush.bf16.xpose.msra.mxu0 0
    %170 = vmatpush.bf16.xpose.msra.mxu0 0
    %171 = vmatpush.bf16.xpose.msra.mxu0 0
    %172 = vmatpush.bf16.xpose.msra.mxu0 0
    %173 = vmatpush.bf16.xpose.msra.mxu0 %v164
    %174 = vmatmul.bf16.gmra.mxu0 %v161
    %v175 = vpop.f32.mrf.mxu0
    %v176 = vadd.f32 0.0, %v175
    %v177 = vpop.f32.mrf.mxu0
    %178 = vdwg.mxu0
    %v180 = vunpack.c.l.b16 %v153
    %v181 = vpack.c.b16 %v180, %v180
    %182 = vrot.lane.b32.xlu0 %v181, 96
    %v183 = vpop.permute.xlu0 %182
    %v185 = vsel %vm159, %v151, 0
    %v188 = vsel %vm159, %v183, 0
    %190 = vmatpush.bf16.xpose.msra.mxu0 0
    %191 = vmatpush.bf16.xpose.msra.mxu0 0
    %192 = vmatpush.bf16.xpose.msra.mxu0 0
    %193 = vmatpush.bf16.xpose.msra.mxu0 0
    %194 = vmatpush.bf16.xpose.msra.mxu0 0
    %195 = vmatpush.bf16.xpose.msra.mxu0 0
    %196 = vmatpush.bf16.xpose.msra.mxu0 0
    %197 = vmatpush.bf16.xpose.msra.mxu0 %v188
    %198 = vmatmul.bf16.gmra.mxu0 %v185
    %v199 = vpop.f32.mrf.mxu0
    %v200 = vadd.f32 0.0, %v199
    %v201 = vpop.f32.mrf.mxu0
    %202 = vdwg.mxu0
    %v203 = vsel %vm147, 1, 0
    %vm204 = vcmp.eq.s32.totalorder %v203, 1
    %v205 = vsel %vm204, %v176, -1e+30
    %v206 = vsel %vm204, %v200, -1e+30
    %v207 = vsel %vm159, %v205, -inf
    %208 = vmax.xlane.f32.xlu0 %v207
    %v209 = vpop.xlane.xlu0 %208
    %v210 = vsel %vm159, %v206, -inf
    %211 = vmax.xlane.f32.xlu0 %v210
    %v212 = vpop.xlane.xlu0 %211
    %v213 = vsub.f32 %v205, %v209
    %v214 = vsub.f32 %v206, %v212
    %v215 = vmul.f32 %v213, 1.442695
    %v216 = vpow.pop %v215
    %v217 = vmul.f32 %v214, 1.442695
    %v218 = vpow.pop %v217
    %v219 = vsel %vm159, %v216, 0.0
    %220 = vadd.xlane.f32.xlu0 %v219
    %v221 = vpop.xlane.xlu0 %220
    %v222 = vsel %vm159, %v218, 0.0
    %223 = vadd.xlane.f32.xlu0 %v222
    %v224 = vpop.xlane.xlu0 %223
    %v225 = vrcp.pop %v221
    %v226 = vrcp.pop %v224
    %v227 = vmul.f32 %v216, %v225
    %v228 = vmul.f32 %v218, %v226
    %v229 = vpack.c.bf16 %v227, %v227
    %v230 = vpack.c.bf16 %v228, %v228
    %231 = vrot.lane.b32.xlu0 %v156, 64
    %v232 = vpop.permute.xlu0 %231
    %v234 = vsel %vm159, %v229, 0
    %vm236 = vcmask 1043456
    %v238 = vsel %vm236, %v232, 0
    %240 = vmatpush.bf16.msra.mxu0 0
    %241 = vmatpush.bf16.msra.mxu0 0
    %242 = vmatpush.bf16.msra.mxu0 0
    %243 = vmatpush.bf16.msra.mxu0 0
    %244 = vmatpush.bf16.msra.mxu0 0
    %245 = vmatpush.bf16.msra.mxu0 0
    %246 = vmatpush.bf16.msra.mxu0 0
    %247 = vmatpush.bf16.msra.mxu0 %v238
    %248 = vmatmul.bf16.gmra.mxu0 %v234
    %v249 = vpop.f32.mrf.mxu0
    %v250 = vadd.f32 0.0, %v249
    %v251 = vpop.f32.mrf.mxu0
    %252 = vdwg.mxu0
    %253 = vrot.lane.b32.xlu0 %v181, 64
    %v254 = vpop.permute.xlu0 %253
    %v256 = vsel %vm159, %v230, 0
    %v259 = vsel %vm236, %v254, 0
    %261 = vmatpush.bf16.msra.mxu0 0
    %262 = vmatpush.bf16.msra.mxu0 0
    %263 = vmatpush.bf16.msra.mxu0 0
    %264 = vmatpush.bf16.msra.mxu0 0
    %265 = vmatpush.bf16.msra.mxu0 0
    %266 = vmatpush.bf16.msra.mxu0 0
    %267 = vmatpush.bf16.msra.mxu0 0
    %268 = vmatpush.bf16.msra.mxu0 %v259
    %269 = vmatmul.bf16.gmra.mxu0 %v256
    %v270 = vpop.f32.mrf.mxu0
    %v271 = vadd.f32 0.0, %v270
    %v272 = vpop.f32.mrf.mxu0
    %273 = vdwg.mxu0
    %v275 = vunpack.c.l.b16 %v150
    %v276 = vpack.c.b16 %v275, %v275
    %277 = vrot.lane.b32.xlu0 %v276, 120
    %v278 = vpop.permute.xlu0 %277
    %279 = vrot.lane.b32.xlu0 %v156, 88
    %v280 = vpop.permute.xlu0 %279
    %v282 = vsel %vm159, %v278, 0
    %v285 = vsel %vm159, %v280, 0
    %287 = vmatpush.bf16.xpose.msra.mxu0 0
    %288 = vmatpush.bf16.xpose.msra.mxu0 0
    %289 = vmatpush.bf16.xpose.msra.mxu0 0
    %290 = vmatpush.bf16.xpose.msra.mxu0 0
    %291 = vmatpush.bf16.xpose.msra.mxu0 0
    %292 = vmatpush.bf16.xpose.msra.mxu0 0
    %293 = vmatpush.bf16.xpose.msra.mxu0 0
    %294 = vmatpush.bf16.xpose.msra.mxu0 %v285
    %295 = vmatmul.bf16.gmra.mxu0 %v282
    %v296 = vpop.f32.mrf.mxu0
    %v297 = vadd.f32 0.0, %v296
    %v298 = vpop.f32.mrf.mxu0
    %299 = vdwg.mxu0
    %v301 = vunpack.c.l.b16 %v151
    %v302 = vpack.c.b16 %v301, %v301
    %303 = vrot.lane.b32.xlu0 %v302, 120
    %v304 = vpop.permute.xlu0 %303
    %305 = vrot.lane.b32.xlu0 %v181, 88
    %v306 = vpop.permute.xlu0 %305
    %v308 = vsel %vm159, %v304, 0
    %v311 = vsel %vm159, %v306, 0
    %313 = vmatpush.bf16.xpose.msra.mxu0 0
    %314 = vmatpush.bf16.xpose.msra.mxu0 0
    %315 = vmatpush.bf16.xpose.msra.mxu0 0
    %316 = vmatpush.bf16.xpose.msra.mxu0 0
    %317 = vmatpush.bf16.xpose.msra.mxu0 0
    %318 = vmatpush.bf16.xpose.msra.mxu0 0
    %319 = vmatpush.bf16.xpose.msra.mxu0 0
    %320 = vmatpush.bf16.xpose.msra.mxu0 %v311
    %321 = vmatmul.bf16.gmra.mxu0 %v308
    %v322 = vpop.f32.mrf.mxu0
    %v323 = vadd.f32 0.0, %v322
    %v324 = vpop.f32.mrf.mxu0
    %325 = vdwg.mxu0
    %v326 = vsel %vm204, %v297, -1e+30
    %v327 = vsel %vm204, %v323, -1e+30
    %v328 = vsel %vm159, %v326, -inf
    %329 = vmax.xlane.f32.xlu0 %v328
    %v330 = vpop.xlane.xlu0 %329
    %v331 = vsel %vm159, %v327, -inf
    %332 = vmax.xlane.f32.xlu0 %v331
    %v333 = vpop.xlane.xlu0 %332
    %v334 = vsub.f32 %v326, %v330
    %v335 = vsub.f32 %v327, %v333
    %v336 = vmul.f32 %v334, 1.442695
    %v337 = vpow.pop %v336
    %v338 = vmul.f32 %v335, 1.442695
    %v339 = vpow.pop %v338
    %v340 = vsel %vm159, %v337, 0.0
    %341 = vadd.xlane.f32.xlu0 %v340
    %v342 = vpop.xlane.xlu0 %341
    %v343 = vsel %vm159, %v339, 0.0
    %344 = vadd.xlane.f32.xlu0 %v343
    %v345 = vpop.xlane.xlu0 %344
    %v346 = vrcp.pop %v342
    %v347 = vrcp.pop %v345
    %v348 = vmul.f32 %v337, %v346
    %v349 = vmul.f32 %v339, %v347
    %v350 = vpack.c.bf16 %v348, %v348
    %v351 = vpack.c.bf16 %v349, %v349
    %352 = vrot.lane.b32.xlu0 %v156, 56
    %v353 = vpop.permute.xlu0 %352
    %v355 = vsel %vm159, %v350, 0
    %v358 = vsel %vm236, %v353, 0
    %360 = vmatpush.bf16.msra.mxu0 0
    %361 = vmatpush.bf16.msra.mxu0 0
    %362 = vmatpush.bf16.msra.mxu0 0
    %363 = vmatpush.bf16.msra.mxu0 0
    %364 = vmatpush.bf16.msra.mxu0 0
    %365 = vmatpush.bf16.msra.mxu0 0
    %366 = vmatpush.bf16.msra.mxu0 0
    %367 = vmatpush.bf16.msra.mxu0 %v358
    %368 = vmatmul.bf16.gmra.mxu0 %v355
    %v369 = vpop.f32.mrf.mxu0
    %v370 = vadd.f32 0.0, %v369
    %v371 = vpop.f32.mrf.mxu0
    %372 = vdwg.mxu0
    %373 = vrot.lane.b32.xlu0 %v181, 56
    %v374 = vpop.permute.xlu0 %373
    %v376 = vsel %vm159, %v351, 0
    %v379 = vsel %vm236, %v374, 0
    %381 = vmatpush.bf16.msra.mxu0 0
    %382 = vmatpush.bf16.msra.mxu0 0
    %383 = vmatpush.bf16.msra.mxu0 0
    %384 = vmatpush.bf16.msra.mxu0 0
    %385 = vmatpush.bf16.msra.mxu0 0
    %386 = vmatpush.bf16.msra.mxu0 0
    %387 = vmatpush.bf16.msra.mxu0 0
    %388 = vmatpush.bf16.msra.mxu0 %v379
    %389 = vmatmul.bf16.gmra.mxu0 %v376
    %v390 = vpop.f32.mrf.mxu0
    %v391 = vadd.f32 0.0, %v390
    %v392 = vpop.f32.mrf.mxu0
    %393 = vdwg.mxu0
    %394 = vrot.lane.b32.xlu0 %v276, 112
    %v395 = vpop.permute.xlu0 %394
    %396 = vrot.lane.b32.xlu0 %v156, 80
    %v397 = vpop.permute.xlu0 %396
    %v399 = vsel %vm159, %v395, 0
    %v402 = vsel %vm159, %v397, 0
    %404 = vmatpush.bf16.xpose.msra.mxu0 0
    %405 = vmatpush.bf16.xpose.msra.mxu0 0
    %406 = vmatpush.bf16.xpose.msra.mxu0 0
    %407 = vmatpush.bf16.xpose.msra.mxu0 0
    %408 = vmatpush.bf16.xpose.msra.mxu0 0
    %409 = vmatpush.bf16.xpose.msra.mxu0 0
    %410 = vmatpush.bf16.xpose.msra.mxu0 0
    %411 = vmatpush.bf16.xpose.msra.mxu0 %v402
    %412 = vmatmul.bf16.gmra.mxu0 %v399
    %v413 = vpop.f32.mrf.mxu0
    %v414 = vadd.f32 0.0, %v413
    %v415 = vpop.f32.mrf.mxu0
    %416 = vdwg.mxu0
    %417 = vrot.lane.b32.xlu0 %v302, 112
    %v418 = vpop.permute.xlu0 %417
    %419 = vrot.lane.b32.xlu0 %v181, 80
    %v420 = vpop.permute.xlu0 %419
    %v422 = vsel %vm159, %v418, 0
    %v425 = vsel %vm159, %v420, 0
    %427 = vmatpush.bf16.xpose.msra.mxu0 0
    %428 = vmatpush.bf16.xpose.msra.mxu0 0
    %429 = vmatpush.bf16.xpose.msra.mxu0 0
    %430 = vmatpush.bf16.xpose.msra.mxu0 0
    %431 = vmatpush.bf16.xpose.msra.mxu0 0
    %432 = vmatpush.bf16.xpose.msra.mxu0 0
    %433 = vmatpush.bf16.xpose.msra.mxu0 0
    %434 = vmatpush.bf16.xpose.msra.mxu0 %v425
    %435 = vmatmul.bf16.gmra.mxu0 %v422
    %v436 = vpop.f32.mrf.mxu0
    %v437 = vadd.f32 0.0, %v436
    %v438 = vpop.f32.mrf.mxu0
    %439 = vdwg.mxu0
    %v440 = vsel %vm204, %v414, -1e+30
    %v441 = vsel %vm204, %v437, -1e+30
    %v442 = vsel %vm159, %v440, -inf
    %443 = vmax.xlane.f32.xlu0 %v442
    %v444 = vpop.xlane.xlu0 %443
    %v445 = vsel %vm159, %v441, -inf
    %446 = vmax.xlane.f32.xlu0 %v445
    %v447 = vpop.xlane.xlu0 %446
    %v448 = vsub.f32 %v440, %v444
    %v449 = vsub.f32 %v441, %v447
    %v450 = vmul.f32 %v448, 1.442695
    %v451 = vpow.pop %v450
    %v452 = vmul.f32 %v449, 1.442695
    %v453 = vpow.pop %v452
    %v454 = vsel %vm159, %v451, 0.0
    %455 = vadd.xlane.f32.xlu0 %v454
    %v456 = vpop.xlane.xlu0 %455
    %v457 = vsel %vm159, %v453, 0.0
    %458 = vadd.xlane.f32.xlu0 %v457
    %v459 = vpop.xlane.xlu0 %458
    %v460 = vrcp.pop %v456
    %v461 = vrcp.pop %v459
    %v462 = vmul.f32 %v451, %v460
    %v463 = vmul.f32 %v453, %v461
    %v464 = vpack.c.bf16 %v462, %v462
    %v465 = vpack.c.bf16 %v463, %v463
    %466 = vrot.lane.b32.xlu0 %v156, 48
    %v467 = vpop.permute.xlu0 %466
    %v469 = vsel %vm159, %v464, 0
    %v472 = vsel %vm236, %v467, 0
    %474 = vmatpush.bf16.msra.mxu0 0
    %475 = vmatpush.bf16.msra.mxu0 0
    %476 = vmatpush.bf16.msra.mxu0 0
    %477 = vmatpush.bf16.msra.mxu0 0
    %478 = vmatpush.bf16.msra.mxu0 0
    %479 = vmatpush.bf16.msra.mxu0 0
    %480 = vmatpush.bf16.msra.mxu0 0
    %481 = vmatpush.bf16.msra.mxu0 %v472
    %482 = vmatmul.bf16.gmra.mxu0 %v469
    %v483 = vpop.f32.mrf.mxu0
    %v484 = vadd.f32 0.0, %v483
    %v485 = vpop.f32.mrf.mxu0
    %486 = vdwg.mxu0
    %487 = vrot.lane.b32.xlu0 %v181, 48
    %v488 = vpop.permute.xlu0 %487
    %v490 = vsel %vm159, %v465, 0
    %v493 = vsel %vm236, %v488, 0
    %495 = vmatpush.bf16.msra.mxu0 0
    %496 = vmatpush.bf16.msra.mxu0 0
    %497 = vmatpush.bf16.msra.mxu0 0
    %498 = vmatpush.bf16.msra.mxu0 0
    %499 = vmatpush.bf16.msra.mxu0 0
    %500 = vmatpush.bf16.msra.mxu0 0
    %501 = vmatpush.bf16.msra.mxu0 0
    %502 = vmatpush.bf16.msra.mxu0 %v493
    %503 = vmatmul.bf16.gmra.mxu0 %v490
    %v504 = vpop.f32.mrf.mxu0
    %v505 = vadd.f32 0.0, %v504
    %v506 = vpop.f32.mrf.mxu0
    %507 = vdwg.mxu0
    %508 = vrot.lane.b32.xlu0 %v276, 104
    %v509 = vpop.permute.xlu0 %508
    %510 = vrot.lane.b32.xlu0 %v156, 72
    %v511 = vpop.permute.xlu0 %510
    %v513 = vsel %vm159, %v509, 0
    %v516 = vsel %vm159, %v511, 0
    %518 = vmatpush.bf16.xpose.msra.mxu0 0
    %519 = vmatpush.bf16.xpose.msra.mxu0 0
    %520 = vmatpush.bf16.xpose.msra.mxu0 0
    %521 = vmatpush.bf16.xpose.msra.mxu0 0
    %522 = vmatpush.bf16.xpose.msra.mxu0 0
    %523 = vmatpush.bf16.xpose.msra.mxu0 0
    %524 = vmatpush.bf16.xpose.msra.mxu0 0
    %525 = vmatpush.bf16.xpose.msra.mxu0 %v516
    %526 = vmatmul.bf16.gmra.mxu0 %v513
    %v527 = vpop.f32.mrf.mxu0
    %v528 = vadd.f32 0.0, %v527
    %v529 = vpop.f32.mrf.mxu0
    %530 = vdwg.mxu0
    %531 = vrot.lane.b32.xlu0 %v302, 104
    %v532 = vpop.permute.xlu0 %531
    %533 = vrot.lane.b32.xlu0 %v181, 72
    %v534 = vpop.permute.xlu0 %533
    %v536 = vsel %vm159, %v532, 0
    %v539 = vsel %vm159, %v534, 0
    %541 = vmatpush.bf16.xpose.msra.mxu0 0
    %542 = vmatpush.bf16.xpose.msra.mxu0 0
    %543 = vmatpush.bf16.xpose.msra.mxu0 0
    %544 = vmatpush.bf16.xpose.msra.mxu0 0
    %545 = vmatpush.bf16.xpose.msra.mxu0 0
    %546 = vmatpush.bf16.xpose.msra.mxu0 0
    %547 = vmatpush.bf16.xpose.msra.mxu0 0
    %548 = vmatpush.bf16.xpose.msra.mxu0 %v539
    %549 = vmatmul.bf16.gmra.mxu0 %v536
    %v550 = vpop.f32.mrf.mxu0
    %v551 = vadd.f32 0.0, %v550
    %v552 = vpop.f32.mrf.mxu0
    %553 = vdwg.mxu0
    %v554 = vsel %vm204, %v528, -1e+30
    %v555 = vsel %vm204, %v551, -1e+30
    %v556 = vsel %vm159, %v554, -inf
    %557 = vmax.xlane.f32.xlu0 %v556
    %v558 = vpop.xlane.xlu0 %557
    %v559 = vsel %vm159, %v555, -inf
    %560 = vmax.xlane.f32.xlu0 %v559
    %v561 = vpop.xlane.xlu0 %560
    %v562 = vsub.f32 %v554, %v558
    %v563 = vsub.f32 %v555, %v561
    %v564 = vmul.f32 %v562, 1.442695
    %v565 = vpow.pop %v564
    %v566 = vmul.f32 %v563, 1.442695
    %v567 = vpow.pop %v566
    %v568 = vsel %vm159, %v565, 0.0
    %569 = vadd.xlane.f32.xlu0 %v568
    %v570 = vpop.xlane.xlu0 %569
    %v571 = vsel %vm159, %v567, 0.0
    %572 = vadd.xlane.f32.xlu0 %v571
    %v573 = vpop.xlane.xlu0 %572
    %v574 = vrcp.pop %v570
    %v575 = vrcp.pop %v573
    %v576 = vmul.f32 %v565, %v574
    %v577 = vmul.f32 %v567, %v575
    %v578 = vpack.c.bf16 %v576, %v576
    %v579 = vpack.c.bf16 %v577, %v577
    %580 = vrot.lane.b32.xlu0 %v156, 40
    %v581 = vpop.permute.xlu0 %580
    %v583 = vsel %vm159, %v578, 0
    %v586 = vsel %vm236, %v581, 0
    %588 = vmatpush.bf16.msra.mxu0 0
    %589 = vmatpush.bf16.msra.mxu0 0
    %590 = vmatpush.bf16.msra.mxu0 0
    %591 = vmatpush.bf16.msra.mxu0 0
    %592 = vmatpush.bf16.msra.mxu0 0
    %593 = vmatpush.bf16.msra.mxu0 0
    %594 = vmatpush.bf16.msra.mxu0 0
    %595 = vmatpush.bf16.msra.mxu0 %v586
    %596 = vmatmul.bf16.gmra.mxu0 %v583
    %v597 = vpop.f32.mrf.mxu0
    %v598 = vadd.f32 0.0, %v597
    %v599 = vpop.f32.mrf.mxu0
    %600 = vdwg.mxu0
    %601 = vrot.lane.b32.xlu0 %v181, 40
    %v602 = vpop.permute.xlu0 %601
    %v604 = vsel %vm159, %v579, 0
    %v607 = vsel %vm236, %v602, 0
    %609 = vmatpush.bf16.msra.mxu0 0
    %610 = vmatpush.bf16.msra.mxu0 0
    %611 = vmatpush.bf16.msra.mxu0 0
    %612 = vmatpush.bf16.msra.mxu0 0
    %613 = vmatpush.bf16.msra.mxu0 0
    %614 = vmatpush.bf16.msra.mxu0 0
    %615 = vmatpush.bf16.msra.mxu0 0
    %616 = vmatpush.bf16.msra.mxu0 %v607
    %617 = vmatmul.bf16.gmra.mxu0 %v604
    %v618 = vpop.f32.mrf.mxu0
    %v619 = vadd.f32 0.0, %v618
    %v620 = vpop.f32.mrf.mxu0
    %621 = vdwg.mxu0
    %624 = vrot.lane.b32.xlu0 %v370, 8
    %v625 = vpop.permute.xlu0 %624
    %626 = vrot.lane.b32.xlu0 %v391, 8
    %v627 = vpop.permute.xlu0 %626
    %632 = vrot.lane.b32.xlu0 %v484, 16
    %v633 = vpop.permute.xlu0 %632
    %634 = vrot.lane.b32.xlu0 %v505, 16
    %v635 = vpop.permute.xlu0 %634
    %640 = vrot.lane.b32.xlu0 %v598, 24
    %v641 = vpop.permute.xlu0 %640
    %642 = vrot.lane.b32.xlu0 %v619, 24
    %v643 = vpop.permute.xlu0 %642
    %v646 = vsel %vm159, %v250, %v625
    %v647 = vsel %vm159, %v271, %v627
    %vm648 = vcmask 130048
    %v649 = vsel %vm648, %v646, %v633
    %v650 = vsel %vm648, %v647, %v635
    %vm651 = vcmask 195584
    %v652 = vsel %vm651, %v649, %v641
    %v653 = vsel %vm651, %v650, %v643
    %v654 = vpack.c.bf16 %v653, %v652
    %v655 = vld [vmem:[%s4] sm:$0xf]
    %v656 = vld [vmem:[%s4 + $0x4] sm:$0xf]
    %v657 = vld [vmem:[%s4 + $0x8] sm:$0xf]
    %v658 = vld [vmem:[%s4 + $0xc] sm:$0xf]
    %v659 = vld [vmem:[%s5] sm:$0x1]
    %v661 = vperm.slane %v659, 0
    %v667 = vunpack.c.l.b16 %v655
    %v668 = vunpack.c.l.b16 %v656
    %v669 = vunpack.c.l.b16 %v657
    %v670 = vunpack.c.l.b16 %v658
    %v671 = vpack.c.b16 %v668, %v667
    %v672 = vpack.c.b16 %v670, %v669
    %v676 = vsel %vm47, %v654, 0
    %678 = vmatpush.bf16.msra.mxu0 0
    %679 = vmatpush.bf16.msra.mxu0 0
    %680 = vmatpush.bf16.msra.mxu0 0
    %681 = vmatpush.bf16.msra.mxu0 0
    %682 = vmatpush.bf16.msra.mxu0 0
    %683 = vmatpush.bf16.msra.mxu0 0
    %684 = vmatpush.bf16.msra.mxu0 %v672
    %685 = vmatpush.bf16.msra.mxu0 %v671
    %686 = vmatmul.bf16.gmra.mxu0 %v676
    %v687 = vpop.f32.mrf.mxu0
    %v688 = vadd.f32 %v661, %v687
    %v689 = vpop.f32.mrf.mxu0
    %v690 = vadd.f32 %v661, %v689
    %691 = vdwg.mxu0
    %v692 = vadd.f32 %v107, %v688
    %v693 = vadd.f32 %v108, %v690
    %v694 = vld [vmem:[%s6] sm:$0x1]
    %v695 = vld [vmem:[%s7] sm:$0x1]
    %v696 = vsel %vm47, %v692, 0.0
    %697 = vadd.xlane.f32.xlu0 %v696
    %v698 = vpop.xlane.xlu0 %697
    %v699 = vsel %vm47, %v693, 0.0
    %700 = vadd.xlane.f32.xlu0 %v699
    %v701 = vpop.xlane.xlu0 %700
    %v702 = vmul.f32 %v698, %v60
    %v703 = vmul.f32 %v701, %v60
    %v704 = vsub.f32 %v692, %v702
    %v705 = vsub.f32 %v693, %v703
    %v706 = vmul.f32 %v704, %v704
    %v707 = vmul.f32 %v705, %v705
    %v708 = vsel %vm47, %v706, 0.0
    %709 = vadd.xlane.f32.xlu0 %v708
    %v710 = vpop.xlane.xlu0 %709
    %v711 = vsel %vm47, %v707, 0.0
    %712 = vadd.xlane.f32.xlu0 %v711
    %v713 = vpop.xlane.xlu0 %712
    %v714 = vmul.f32 %v710, %v60
    %v715 = vmul.f32 %v713, %v60
    %v716 = vadd.f32 %v714, 1e-05
    %v717 = vadd.f32 %v715, 1e-05
    %v718 = vrsqrt.pop %v716
    %v719 = vmul.f32 %v718, %v716
    %v720 = vmul.f32 %v719, %v718
    %v721 = vmul.f32 0.5, %v720
    %v722 = vsub.f32 1.5, %v721
    %v723 = vmul.f32 %v718, %v722
    %vm724 = vweird.f32 %v716
    %vm725 = vweird.f32 %v718
    %vm726 = vmor %vm724, %vm725
    %v727 = vsel %vm726, %v718, %v723
    %v728 = vrsqrt.pop %v717
    %v729 = vmul.f32 %v728, %v717
    %v730 = vmul.f32 %v729, %v728
    %v731 = vmul.f32 0.5, %v730
    %v732 = vsub.f32 1.5, %v731
    %v733 = vmul.f32 %v728, %v732
    %vm734 = vweird.f32 %v717
    %vm735 = vweird.f32 %v728
    %vm736 = vmor %vm734, %vm735
    %v737 = vsel %vm736, %v728, %v733
    %v738 = vmul.f32 %v704, %v727
    %v739 = vmul.f32 %v705, %v737
    %v741 = vperm.slane %v694, 0
    %v743 = vmul.f32 %v738, %v741
    %v744 = vmul.f32 %v739, %v741
    %v746 = vperm.slane %v695, 0
    %v748 = vadd.f32 %v743, %v746
    %v749 = vadd.f32 %v744, %v746
    %v750 = vpack.c.bf16 %v749, %v748
    %v751 = vld [vmem:[%s8] sm:$0xf]
    %v752 = vld [vmem:[%s8 + $0x4] sm:$0xf]
    %v753 = vld [vmem:[%s8 + $0x8] sm:$0xf]
    %v754 = vld [vmem:[%s8 + $0xc] sm:$0xf]
    %v755 = vld [vmem:[%s9] sm:$0x1]
    %v757 = vperm.slane %v755, 0
    %v763 = vunpack.c.l.b16 %v751
    %v764 = vunpack.c.l.b16 %v752
    %v765 = vunpack.c.l.b16 %v753
    %v766 = vunpack.c.l.b16 %v754
    %v767 = vpack.c.b16 %v764, %v763
    %v768 = vpack.c.b16 %v766, %v765
    %v772 = vsel %vm47, %v750, 0
    %774 = vmatpush.bf16.msra.mxu0 0
    %775 = vmatpush.bf16.msra.mxu0 0
    %776 = vmatpush.bf16.msra.mxu0 0
    %777 = vmatpush.bf16.msra.mxu0 0
    %778 = vmatpush.bf16.msra.mxu0 0
    %779 = vmatpush.bf16.msra.mxu0 0
    %780 = vmatpush.bf16.msra.mxu0 %v768
    %781 = vmatpush.bf16.msra.mxu0 %v767
    %782 = vmatmul.bf16.gmra.mxu0 %v772
    %v783 = vpop.f32.mrf.mxu0
    %v784 = vadd.f32 %v757, %v783
    %v785 = vpop.f32.mrf.mxu0
    %v786 = vadd.f32 %v757, %v785
    %787 = vdwg.mxu0
    %v788 = vmax.f32 %v784, 0.0
    %v789 = vmax.f32 %v786, 0.0
    %v790 = vpack.c.bf16 %v789, %v788
    %v791 = vld [vmem:[%s10] sm:$0xf]
    %v792 = vld [vmem:[%s10 + $0x4] sm:$0xf]
    %v793 = vld [vmem:[%s10 + $0x8] sm:$0xf]
    %v794 = vld [vmem:[%s10 + $0xc] sm:$0xf]
    %v795 = vld [vmem:[%s10 + $0x10] sm:$0xf]
    %v796 = vld [vmem:[%s10 + $0x14] sm:$0xf]
    %v797 = vld [vmem:[%s10 + $0x18] sm:$0xf]
    %v798 = vld [vmem:[%s10 + $0x1c] sm:$0xf]
    %v799 = vld [vmem:[%s10 + $0x20] sm:$0xf]
    %v800 = vld [vmem:[%s10 + $0x24] sm:$0xf]
    %v801 = vld [vmem:[%s10 + $0x28] sm:$0xf]
    %v802 = vld [vmem:[%s10 + $0x2c] sm:$0xf]
    %v803 = vld [vmem:[%s10 + $0x30] sm:$0xf]
    %v804 = vld [vmem:[%s10 + $0x34] sm:$0xf]
    %v805 = vld [vmem:[%s10 + $0x38] sm:$0xf]
    %v806 = vld [vmem:[%s10 + $0x3c] sm:$0xf]
    %v807 = vld [vmem:[%s11] sm:$0x1]
    %v809 = vperm.slane %v807, 0
    %v827 = vunpack.c.l.b16 %v791
    %v828 = vunpack.c.l.b16 %v792
    %v829 = vunpack.c.l.b16 %v793
    %v830 = vunpack.c.l.b16 %v794
    %v831 = vunpack.c.l.b16 %v795
    %v832 = vunpack.c.l.b16 %v796
    %v833 = vunpack.c.l.b16 %v797
    %v834 = vunpack.c.l.b16 %v798
    %v835 = vunpack.c.l.b16 %v799
    %v836 = vunpack.c.l.b16 %v800
    %v837 = vunpack.c.l.b16 %v801
    %v838 = vunpack.c.l.b16 %v802
    %v839 = vunpack.c.l.b16 %v803
    %v840 = vunpack.c.l.b16 %v804
    %v841 = vunpack.c.l.b16 %v805
    %v842 = vunpack.c.l.b16 %v806
    %v843 = vpack.c.b16 %v828, %v827
    %v844 = vpack.c.b16 %v830, %v829
    %v845 = vpack.c.b16 %v832, %v831
    %v846 = vpack.c.b16 %v834, %v833
    %v847 = vpack.c.b16 %v836, %v835
    %v848 = vpack.c.b16 %v838, %v837
    %v849 = vpack.c.b16 %v840, %v839
    %v850 = vpack.c.b16 %v842, %v841
    %859 = vmatpush.bf16.msra.mxu0 %v850
    %860 = vmatpush.bf16.msra.mxu0 %v849
    %861 = vmatpush.bf16.msra.mxu0 %v848
    %862 = vmatpush.bf16.msra.mxu0 %v847
    %863 = vmatpush.bf16.msra.mxu0 %v846
    %864 = vmatpush.bf16.msra.mxu0 %v845
    %865 = vmatpush.bf16.msra.mxu0 %v844
    %866 = vmatpush.bf16.msra.mxu0 %v843
    %867 = vmatmul.bf16.gmra.mxu0 %v790
    %v868 = vpop.f32.mrf.mxu0
    %v869 = vadd.f32 %v809, %v868
    %v870 = vpop.f32.mrf.mxu0
    %v871 = vadd.f32 %v809, %v870
    %872 = vdwg.mxu0
    %v873 = vadd.f32 %v748, %v869
    %v874 = vadd.f32 %v749, %v871
    %875 = vst.msk [vmem:[#allocation2] sm:$0xff] %vm47, %v873
    %876 = vst.msk [vmem:[#allocation2 + $0x8] sm:$0xff] %vm47, %v874
    // Predicated region
    $region50: #{tpu_custom_call.1} parent=1 // pred_check
      _
    $region51: #{tpu_custom_call.1} parent=1 // pred_check_branch
      %878 = sbr.rel (0) target = $region53
    $region52: #{tpu_custom_call.1} parent=1 // pred_region
      %880 = vsyncadd [#allocation3], 0
      %s881 = sshll.u32 [#allocation2], 4
      %s882 = int_to_ptr.vmem [resolvable:$true] %s881
      %s883 = sshll.u32 %s12, 4
      %s884 = int_to_ptr.hbm [resolvable:$true] %s883
      %889 = dma.vmem_to_hbm [thread:$0]  %s882, 256, %s884, [#allocation3], 128, 128, 8
    $region53: #{tpu_custom_call.1} parent=1 // pred_fallthru
      _
    // Predicated region
    $region54: #{tpu_custom_call.1} parent=1 // pred_check
      _
    $region55: #{tpu_custom_call.1} parent=1 // pred_check_branch
      %891 = sbr.rel (0) target = $region57
    $region56: #{tpu_custom_call.1} parent=1 // pred_region
      %893 = dma.done [#allocation3], 256
    $region57: #{tpu_custom_call.1} parent=1 // pred_fallthru
      _
    %894 = vsyncpa [#allocation3], 1

</llo_original>
